<compile_context>
chip_gen: v7x
topology: tpu7x:2x2x1
jax: 0.10.0
libtpu: 0.0.40
codegen_flags: <defaults>
</compile_context>

<pallas_src>
import functools

import jax
import jax.numpy as jnp
from jax.experimental import pallas as pl
from jax.experimental.pallas import tpu as pltpu


# ---------------------------------------------------------------------------
# Kernel
# ---------------------------------------------------------------------------
def _separate_fc_kernel(x_ref, w_ref, o_ref, *, pp_parts: int, slab: bool):
    # x_ref: [PP, TM, c_in]    activations, part-major
    # w_ref: [PP, c_in, c_out] weights (VMEM-resident across all n-tiles)
    # o_ref: [1, TM, PP*c_out] if slab else [PP, TM, c_out]
    accs = []
    for pp in range(pp_parts):           # static unroll over parts in block
        acc = jnp.dot(x_ref[pp], w_ref[pp],
                      preferred_element_type=jnp.float32)
        if slab:
            accs.append(acc)
        else:
            o_ref[pp] = acc.astype(o_ref.dtype)
    if slab:
        # One lane-dense full-width store (slab width PP*c_out is a multiple
        # of 128) instead of PP sub-128-lane masked stores.
        o_ref[0] = jnp.concatenate(accs, axis=-1).astype(o_ref.dtype)


# ---------------------------------------------------------------------------
# Tiling heuristics (generation aware)
# ---------------------------------------------------------------------------
def _largest_divisor_leq(p: int, cap: int) -> int:
    best = 1
    for d in range(1, min(p, cap) + 1):
        if p % d == 0:
            best = d
    return best


def _sublane_quantum(itemsize: int) -> int:
    # f32 -> 8, bf16 -> 16, int8/fp8 -> 32 (sub-32-bit dtypes pack sublanes)
    return max(8, 32 // max(1, itemsize))


def _tpu_memory_profile():
    """(vmem_budget, vmem_limit, tm_cap, multi_tc) — best-effort per chip."""
    try:
        vmem_cap = int(pltpu.get_tpu_info().vmem_capacity_bytes)
    except Exception:
        vmem_cap = None
    try:
        kind = jax.devices()[0].device_kind.lower()
        multi_tc = "v7" in kind
    except Exception:
        multi_tc = False
    if vmem_cap is None:
        vmem_cap = 64 * 1024 * 1024          # conservative (v7x-sized) fallback
    if vmem_cap >= 96 * 1024 * 1024:         # v5e / v6e: 128 MiB physical VMEM
        return 48 * 1024 * 1024, 96 * 1024 * 1024, 512, multi_tc
    # v7x-class: 64 MiB physical, 32 MiB scoped default — stay tight.
    return 24 * 1024 * 1024, 44 * 1024 * 1024, 512, multi_tc


def _choose_tiles(p, n, c_in, c_out, x_item, w_item, o_item, *,
                  vmem_budget, vmem_limit, tm_cap, multi_tc, w_bufs):
    pp = _largest_divisor_leq(p, 8)
    sub = _sublane_quantum(min(x_item, o_item))
    tm = n if n <= tm_cap else max(sub, (tm_cap // sub) * sub)
    num_nt_est = pl.cdiv(n, tm)

    # Megacore-motivated split of the part axis: only worthwhile when a 2nd
    # TensorCore exists (v7x) AND the n-tile axis can't already feed it.
    if multi_tc and num_nt_est < 2 and p // pp < 2:
        smaller = _largest_divisor_leq(p, max(1, pp // 2))
        if p // smaller >= 2:
            pp = smaller

    def cost(pp_, tm_):
        # x and out blocks are double-buffered by the pipeline; the weight
        # block may be single-buffered (resident across the n-tile axis).
        return (2 * pp_ * tm_ * c_in * x_item
                + w_bufs * pp_ * c_in * c_out * w_item
                + 2 * tm_ * pp_ * c_out * o_item)

    while cost(pp, tm) > vmem_budget:
        if tm > sub:
            tm = max(sub, ((tm // 2) // sub) * sub)   # keep sublane alignment
        elif pp > 1:
            pp = _largest_divisor_leq(p, pp - 1)
        else:
            break

    if cost(pp, tm) > vmem_limit:
        raise ValueError(
            "SeparateFCs blocks do not fit VMEM: need "
            f"{cost(pp, tm)} bytes (pp={pp}, tm={tm}, c_in={c_in}, "
            f"c_out={c_out}) > vmem_limit_bytes={vmem_limit}")
    return pp, tm


# ---------------------------------------------------------------------------
# pallas_call plumbing
# ---------------------------------------------------------------------------
def _run_kernel(x_pm, fc, pp, tm, *, slab, single_w_buffer, vmem_limit):
    p, n, c_in = x_pm.shape
    c_out = fc.shape[-1]
    num_pb = p // pp
    num_nt = pl.cdiv(n, tm)

    if slab:
        out_shape = jax.ShapeDtypeStruct((num_pb, n, pp * c_out), x_pm.dtype)
        out_spec = pl.BlockSpec((1, tm, pp * c_out), lambda i, j: (i, j, 0))
    else:
        out_shape = jax.ShapeDtypeStruct((p, n, c_out), x_pm.dtype)
        out_spec = pl.BlockSpec((pp, tm, c_out), lambda i, j: (i, j, 0))

    # Weight block index only changes with the outer (part-block) axis, so it
    # stays VMEM-resident across all inner n-tiles.  With many n-tiles per
    # part block we drop it to a single buffer and spend the reclaimed VMEM
    # on larger n-tiles.
    w_kwargs = {}
    if single_w_buffer:
        w_kwargs["pipeline_mode"] = pl.Buffered(1)
    w_spec = pl.BlockSpec((pp, c_in, c_out), lambda i, j: (i, 0, 0), **w_kwargs)

    kernel = functools.partial(_separate_fc_kernel, pp_parts=pp, slab=slab)

    return pl.pallas_call(
        kernel,
        out_shape=out_shape,
        grid_spec=pltpu.PrefetchScalarGridSpec(
            num_scalar_prefetch=0,
            grid=(num_pb, num_nt),        # part blocks outer, n-tiles inner
            in_specs=[
                # x (part-major): block [PP, TM, c_in]
                pl.BlockSpec((pp, tm, c_in), lambda i, j: (i, j, 0)),
                w_spec,
            ],
            out_specs=out_spec,
        ),
        compiler_params=pltpu.CompilerParams(
            dimension_semantics=("parallel", "parallel"),
            vmem_limit_bytes=vmem_limit,
        ),
    )(x_pm, fc)


def _prepare_weights(fc_bin, norm, compute_dtype):
    tgt = compute_dtype if compute_dtype is not None else fc_bin.dtype
    if norm:
        # F.normalize(fc_bin, dim=1): v / max(||v||_2, 1e-12) along c_in.
        # Hoisted out of the kernel (computed once, not once per grid step).
        w32 = fc_bin.astype(jnp.float32)
        nrm = jnp.sqrt(jnp.sum(w32 * w32, axis=1, keepdims=True))
        return (w32 / jnp.maximum(nrm, 1e-12)).astype(tgt)
    return fc_bin.astype(tgt) if compute_dtype is not None else fc_bin


def _separate_fcs_part_major_raw(x_pm, fc, *, allow_slab):
    p, n, c_in = x_pm.shape
    p_w, c_in_w, c_out = fc.shape
    assert p == p_w and c_in == c_in_w

    vmem_budget, vmem_limit, tm_cap, multi_tc = _tpu_memory_profile()
    x_item = jnp.dtype(x_pm.dtype).itemsize
    w_item = jnp.dtype(fc.dtype).itemsize

    # Single-buffer the weight block only when enough n-tiles run under one
    # resident weight block to amortize the once-per-part-block DMA exposure.
    tm_est = n if n <= tm_cap else tm_cap
    single_w = pl.cdiv(n, tm_est) >= 8

    pp, tm = _choose_tiles(p, n, c_in, c_out, x_item, w_item, x_item,
                           vmem_budget=vmem_budget, vmem_limit=vmem_limit,
                           tm_cap=tm_cap, multi_tc=multi_tc,
                           w_bufs=1 if single_w else 2)

    # Lane-dense output slab whenever the per-block slab width is a multiple
    # of 128 lanes (covers sub-128 c_out, e.g. c_out=32 & PP=8 -> 256 lanes).
    slab = allow_slab and ((pp * c_out) % 128 == 0)

    try:
        out_raw = _run_kernel(x_pm, fc, pp, tm, slab=slab,
                              single_w_buffer=single_w, vmem_limit=vmem_limit)
    except Exception:
        if not single_w:
            raise
        # pl.Buffered(1) rejected by this jax/libtpu: fall back to the
        # default double-buffered weight block.
        out_raw = _run_kernel(x_pm, fc, pp, tm, slab=slab,
                              single_w_buffer=False, vmem_limit=vmem_limit)
    return out_raw, pp, slab


# ---------------------------------------------------------------------------
# Public wrappers
# ---------------------------------------------------------------------------
def separate_fcs_part_major(x_pm, fc_bin, norm=False, compute_dtype=None):
    """Part-major interface: x_pm [p, n, c_in] -> [p, n, c_out].

    No wrapper-side transposes — use this when activations are kept
    part-major upstream; it removes two full HBM passes vs. `separate_fcs`.
    (For c_out < 128 the per-part stores are lane-masked, but that is cheaper
    than adding an extra output un-interleave pass over HBM.)
    """
    fc = _prepare_weights(fc_bin, norm, compute_dtype)
    if compute_dtype is not None:
        x_pm = x_pm.astype(compute_dtype)
    out, _, _ = _separate_fcs_part_major_raw(x_pm, fc, allow_slab=False)
    return out


def separate_fcs(x, fc_bin, norm=False, compute_dtype=None):
    """Module-layout interface: x [n, c_in, p] -> [n, c_out, p].

    The two layout permutes below mirror the PyTorch module's own
    .permute().contiguous() calls; callers that can keep activations
    part-major should use `separate_fcs_part_major` and skip them entirely.
    """
    n, c_in, p = x.shape
    p_w, c_in_w, c_out = fc_bin.shape
    assert p == p_w and c_in == c_in_w

    fc = _prepare_weights(fc_bin, norm, compute_dtype)
    if compute_dtype is not None:
        x = x.astype(compute_dtype)

    x_pm = jnp.transpose(x, (2, 0, 1))                        # [p, n, c_in]
    out_raw, pp, slab = _separate_fcs_part_major_raw(x_pm, fc, allow_slab=True)

    if slab:
        # [p//PP, n, PP*c_out] : part index = block_i * PP + pp
        num_pb = p // pp
        out = out_raw.reshape(num_pb, n, pp, c_out)
        out = jnp.transpose(out, (1, 3, 0, 2)).reshape(n, c_out, p)
    else:
        out = jnp.transpose(out_raw, (1, 2, 0))               # [n, c_out, p]
    return out


def init_fc_bin(key, parts_num, in_channels, out_channels, dtype=jnp.float32):
    # xavier_uniform_ on a (p, c_in, c_out) tensor:
    #   fan_in  = size(1) * receptive_field = c_in * c_out
    #   fan_out = size(0) * receptive_field = p * c_out
    fan_in = in_channels * out_channels
    fan_out = parts_num * out_channels
    bound = (6.0 / (fan_in + fan_out)) ** 0.5
    return jax.random.uniform(
        key, (parts_num, in_channels, out_channels), dtype=dtype,
        minval=-bound, maxval=bound)


# ---------------------------------------------------------------------------
# Self-test
# ---------------------------------------------------------------------------
if __name__ == "__main__":
    key = jax.random.PRNGKey(0)
    kx1, kx2, kw1, kw2, kw3 = jax.random.split(key, 5)

    n, c_in = 16, 32

    # ---- case 1: p=8, c_out=32 -> slab width PP*c_out = 256 (new lane-dense
    #      path for sub-128 c_out), norm=False ----
    p1, co1 = 8, 32
    x1 = jax.random.normal(kx1, (n, c_in, p1), dtype=jnp.float32)
    w1 = init_fc_bin(kw1, p1, c_in, co1)
    out1 = jax.block_until_ready(separate_fcs(x1, w1, norm=False))
    ref1 = jnp.einsum("ncp,pco->nop", x1, w1)               # [n, c_out, p]
    assert out1.shape == (n, co1, p1)
    assert jnp.allclose(out1, ref1, atol=2e-5, rtol=2e-5), \
        float(jnp.max(jnp.abs(out1 - ref1)))

    # ---- case 2: same weights, norm=True ----
    out2 = jax.block_until_ready(separate_fcs(x1, w1, norm=True))
    w1n = w1 / jnp.maximum(jnp.linalg.norm(w1, axis=1, keepdims=True), 1e-12)
    ref2 = jnp.einsum("ncp,pco->nop", x1, w1n)
    assert jnp.allclose(out2, ref2, atol=2e-5, rtol=2e-5), \
        float(jnp.max(jnp.abs(out2 - ref2)))

    # ---- case 3: c_out multiple of 128 (naturally lane-dense slab) ----
    co3 = 128
    w3 = init_fc_bin(kw2, p1, c_in, co3)
    out3 = jax.block_until_ready(separate_fcs(x1, w3, norm=False))
    ref3 = jnp.einsum("ncp,pco->nop", x1, w3)
    assert out3.shape == (n, co3, p1)
    assert jnp.allclose(out3, ref3, atol=2e-5, rtol=2e-5), \
        float(jnp.max(jnp.abs(out3 - ref3)))

    # ---- case 4: p=6, c_out=32 -> PP*c_out not a multiple of 128,
    #      exercises the per-part (non-slab) store path ----
    p4, co4 = 6, 32
    x4 = jax.random.normal(kx2, (n, c_in, p4), dtype=jnp.float32)
    w4 = init_fc_bin(kw3, p4, c_in, co4)
    out4 = jax.block_until_ready(separate_fcs(x4, w4, norm=False))
    ref4 = jnp.einsum("ncp,pco->nop", x4, w4)
    assert out4.shape == (n, co4, p4)
    assert jnp.allclose(out4, ref4, atol=2e-5, rtol=2e-5), \
        float(jnp.max(jnp.abs(out4 - ref4)))

    # ---- case 5: part-major entry point (zero wrapper transposes) ----
    x1_pm = jnp.transpose(x1, (2, 0, 1))
    out5 = jax.block_until_ready(separate_fcs_part_major(x1_pm, w3))
    ref5 = jnp.einsum("pnc,pco->pno", x1_pm, w3)
    assert out5.shape == (p1, n, co3)
    assert jnp.allclose(out5, ref5, atol=2e-5, rtol=2e-5), \
        float(jnp.max(jnp.abs(out5 - ref5)))

    # ---- case 6: bf16 compute dtype (halves HBM traffic; f32 accumulation) ----
    out6 = jax.block_until_ready(
        separate_fcs(x1, w1, norm=False, compute_dtype=jnp.bfloat16))
    assert out6.shape == (n, co1, p1)
    assert bool(jnp.all(jnp.isfinite(out6.astype(jnp.float32))))
    assert jnp.allclose(out6.astype(jnp.float32), ref1, atol=0.1, rtol=0.1)

    print("KERNEL_OK")
</pallas_src>

<mosaic_0001>
module attributes {stable_mosaic.version = 11 : i64} {
  func.func @_separate_fc_kernel(%arg0: i32, %arg1: i32, %arg2: memref<8x16x32xf32, #tpu.memory_space<vmem>>, %arg3: memref<8x32x32xf32, #tpu.memory_space<vmem>>, %arg4: memref<1x16x256xf32, #tpu.memory_space<vmem>>) attributes {dimension_semantics = [#tpu.dimension_semantics<parallel>, #tpu.dimension_semantics<parallel>], iteration_bounds = array<i64: 1, 1>, scalar_prefetch = 0 : i64, scratch_operands = 0 : i64, tpu.core_type = #tpu.core_type<tc>, window_params = [{transform_indices = @transform_0, window_bounds = array<i64: 8, 16, 32>}, {transform_indices = @transform_1, window_bounds = array<i64: 8, 32, 32>}, {transform_indices = @transform_2, window_bounds = array<i64: 1, 16, 256>}]} {
    %c0 = arith.constant 0 : index
    %c0_0 = arith.constant 0 : index
    %c0_1 = arith.constant 0 : index
    %0 = vector.load %arg2[%c0, %c0_0, %c0_1] : memref<8x16x32xf32, #tpu.memory_space<vmem>>, vector<1x16x32xf32>
    %1 = vector.shape_cast %0 : vector<1x16x32xf32> to vector<16x32xf32>
    %c0_2 = arith.constant 0 : index
    %c0_3 = arith.constant 0 : index
    %c0_4 = arith.constant 0 : index
    %2 = vector.load %arg3[%c0_2, %c0_3, %c0_4] : memref<8x32x32xf32, #tpu.memory_space<vmem>>, vector<1x32x32xf32>
    %3 = vector.shape_cast %2 : vector<1x32x32xf32> to vector<32x32xf32>
    %cst = arith.constant dense<0.000000e+00> : vector<16x32xf32>
    %4 = tpu.matmul %1, %3, %cst {dimension_numbers = #tpu.dot_dimension_numbers<[1], [0], [0], [1], [0, 0, 1, 1], [], []>} : vector<16x32xf32>, vector<32x32xf32>, vector<16x32xf32> -> vector<16x32xf32>
    %c1 = arith.constant 1 : index
    %c0_5 = arith.constant 0 : index
    %c0_6 = arith.constant 0 : index
    %5 = vector.load %arg2[%c1, %c0_5, %c0_6] : memref<8x16x32xf32, #tpu.memory_space<vmem>>, vector<1x16x32xf32>
    %6 = vector.shape_cast %5 : vector<1x16x32xf32> to vector<16x32xf32>
    %c1_7 = arith.constant 1 : index
    %c0_8 = arith.constant 0 : index
    %c0_9 = arith.constant 0 : index
    %7 = vector.load %arg3[%c1_7, %c0_8, %c0_9] : memref<8x32x32xf32, #tpu.memory_space<vmem>>, vector<1x32x32xf32>
    %8 = vector.shape_cast %7 : vector<1x32x32xf32> to vector<32x32xf32>
    %cst_10 = arith.constant dense<0.000000e+00> : vector<16x32xf32>
    %9 = tpu.matmul %6, %8, %cst_10 {dimension_numbers = #tpu.dot_dimension_numbers<[1], [0], [0], [1], [0, 0, 1, 1], [], []>} : vector<16x32xf32>, vector<32x32xf32>, vector<16x32xf32> -> vector<16x32xf32>
    %c2 = arith.constant 2 : index
    %c0_11 = arith.constant 0 : index
    %c0_12 = arith.constant 0 : index
    %10 = vector.load %arg2[%c2, %c0_11, %c0_12] : memref<8x16x32xf32, #tpu.memory_space<vmem>>, vector<1x16x32xf32>
    %11 = vector.shape_cast %10 : vector<1x16x32xf32> to vector<16x32xf32>
    %c2_13 = arith.constant 2 : index
    %c0_14 = arith.constant 0 : index
    %c0_15 = arith.constant 0 : index
    %12 = vector.load %arg3[%c2_13, %c0_14, %c0_15] : memref<8x32x32xf32, #tpu.memory_space<vmem>>, vector<1x32x32xf32>
    %13 = vector.shape_cast %12 : vector<1x32x32xf32> to vector<32x32xf32>
    %cst_16 = arith.constant dense<0.000000e+00> : vector<16x32xf32>
    %14 = tpu.matmul %11, %13, %cst_16 {dimension_numbers = #tpu.dot_dimension_numbers<[1], [0], [0], [1], [0, 0, 1, 1], [], []>} : vector<16x32xf32>, vector<32x32xf32>, vector<16x32xf32> -> vector<16x32xf32>
    %c3 = arith.constant 3 : index
    %c0_17 = arith.constant 0 : index
    %c0_18 = arith.constant 0 : index
    %15 = vector.load %arg2[%c3, %c0_17, %c0_18] : memref<8x16x32xf32, #tpu.memory_space<vmem>>, vector<1x16x32xf32>
    %16 = vector.shape_cast %15 : vector<1x16x32xf32> to vector<16x32xf32>
    %c3_19 = arith.constant 3 : index
    %c0_20 = arith.constant 0 : index
    %c0_21 = arith.constant 0 : index
    %17 = vector.load %arg3[%c3_19, %c0_20, %c0_21] : memref<8x32x32xf32, #tpu.memory_space<vmem>>, vector<1x32x32xf32>
    %18 = vector.shape_cast %17 : vector<1x32x32xf32> to vector<32x32xf32>
    %cst_22 = arith.constant dense<0.000000e+00> : vector<16x32xf32>
    %19 = tpu.matmul %16, %18, %cst_22 {dimension_numbers = #tpu.dot_dimension_numbers<[1], [0], [0], [1], [0, 0, 1, 1], [], []>} : vector<16x32xf32>, vector<32x32xf32>, vector<16x32xf32> -> vector<16x32xf32>
    %c4 = arith.constant 4 : index
    %c0_23 = arith.constant 0 : index
    %c0_24 = arith.constant 0 : index
    %20 = vector.load %arg2[%c4, %c0_23, %c0_24] : memref<8x16x32xf32, #tpu.memory_space<vmem>>, vector<1x16x32xf32>
    %21 = vector.shape_cast %20 : vector<1x16x32xf32> to vector<16x32xf32>
    %c4_25 = arith.constant 4 : index
    %c0_26 = arith.constant 0 : index
    %c0_27 = arith.constant 0 : index
    %22 = vector.load %arg3[%c4_25, %c0_26, %c0_27] : memref<8x32x32xf32, #tpu.memory_space<vmem>>, vector<1x32x32xf32>
    %23 = vector.shape_cast %22 : vector<1x32x32xf32> to vector<32x32xf32>
    %cst_28 = arith.constant dense<0.000000e+00> : vector<16x32xf32>
    %24 = tpu.matmul %21, %23, %cst_28 {dimension_numbers = #tpu.dot_dimension_numbers<[1], [0], [0], [1], [0, 0, 1, 1], [], []>} : vector<16x32xf32>, vector<32x32xf32>, vector<16x32xf32> -> vector<16x32xf32>
    %c5 = arith.constant 5 : index
    %c0_29 = arith.constant 0 : index
    %c0_30 = arith.constant 0 : index
    %25 = vector.load %arg2[%c5, %c0_29, %c0_30] : memref<8x16x32xf32, #tpu.memory_space<vmem>>, vector<1x16x32xf32>
    %26 = vector.shape_cast %25 : vector<1x16x32xf32> to vector<16x32xf32>
    %c5_31 = arith.constant 5 : index
    %c0_32 = arith.constant 0 : index
    %c0_33 = arith.constant 0 : index
    %27 = vector.load %arg3[%c5_31, %c0_32, %c0_33] : memref<8x32x32xf32, #tpu.memory_space<vmem>>, vector<1x32x32xf32>
    %28 = vector.shape_cast %27 : vector<1x32x32xf32> to vector<32x32xf32>
    %cst_34 = arith.constant dense<0.000000e+00> : vector<16x32xf32>
    %29 = tpu.matmul %26, %28, %cst_34 {dimension_numbers = #tpu.dot_dimension_numbers<[1], [0], [0], [1], [0, 0, 1, 1], [], []>} : vector<16x32xf32>, vector<32x32xf32>, vector<16x32xf32> -> vector<16x32xf32>
    %c6 = arith.constant 6 : index
    %c0_35 = arith.constant 0 : index
    %c0_36 = arith.constant 0 : index
    %30 = vector.load %arg2[%c6, %c0_35, %c0_36] : memref<8x16x32xf32, #tpu.memory_space<vmem>>, vector<1x16x32xf32>
    %31 = vector.shape_cast %30 : vector<1x16x32xf32> to vector<16x32xf32>
    %c6_37 = arith.constant 6 : index
    %c0_38 = arith.constant 0 : index
    %c0_39 = arith.constant 0 : index
    %32 = vector.load %arg3[%c6_37, %c0_38, %c0_39] : memref<8x32x32xf32, #tpu.memory_space<vmem>>, vector<1x32x32xf32>
    %33 = vector.shape_cast %32 : vector<1x32x32xf32> to vector<32x32xf32>
    %cst_40 = arith.constant dense<0.000000e+00> : vector<16x32xf32>
    %34 = tpu.matmul %31, %33, %cst_40 {dimension_numbers = #tpu.dot_dimension_numbers<[1], [0], [0], [1], [0, 0, 1, 1], [], []>} : vector<16x32xf32>, vector<32x32xf32>, vector<16x32xf32> -> vector<16x32xf32>
    %c7 = arith.constant 7 : index
    %c0_41 = arith.constant 0 : index
    %c0_42 = arith.constant 0 : index
    %35 = vector.load %arg2[%c7, %c0_41, %c0_42] : memref<8x16x32xf32, #tpu.memory_space<vmem>>, vector<1x16x32xf32>
    %36 = vector.shape_cast %35 : vector<1x16x32xf32> to vector<16x32xf32>
    %c7_43 = arith.constant 7 : index
    %c0_44 = arith.constant 0 : index
    %c0_45 = arith.constant 0 : index
    %37 = vector.load %arg3[%c7_43, %c0_44, %c0_45] : memref<8x32x32xf32, #tpu.memory_space<vmem>>, vector<1x32x32xf32>
    %38 = vector.shape_cast %37 : vector<1x32x32xf32> to vector<32x32xf32>
    %cst_46 = arith.constant dense<0.000000e+00> : vector<16x32xf32>
    %39 = tpu.matmul %36, %38, %cst_46 {dimension_numbers = #tpu.dot_dimension_numbers<[1], [0], [0], [1], [0, 0, 1, 1], [], []>} : vector<16x32xf32>, vector<32x32xf32>, vector<16x32xf32> -> vector<16x32xf32>
    %40 = tpu.concatenate %4, %9, %14, %19, %24, %29, %34, %39 in 1 : vector<16x32xf32>, vector<16x32xf32>, vector<16x32xf32>, vector<16x32xf32>, vector<16x32xf32>, vector<16x32xf32>, vector<16x32xf32>, vector<16x32xf32> -> vector<16x256xf32>
    %c0_47 = arith.constant 0 : index
    %c0_48 = arith.constant 0 : index
    %c0_49 = arith.constant 0 : index
    %41 = vector.load %arg4[%c0_47, %c0_48, %c0_49] : memref<1x16x256xf32, #tpu.memory_space<vmem>>, vector<1x16x256xf32>
    %42 = vector.shape_cast %41 : vector<1x16x256xf32> to vector<16x256xf32>
    %43 = vector.shape_cast %40 : vector<16x256xf32> to vector<1x16x256xf32>
    tpu.vector_store %arg4[%c0_47, %c0_48, %c0_49], %43 {strides = array<i32>} : memref<1x16x256xf32, #tpu.memory_space<vmem>>, vector<1x16x256xf32>,
    return
  }
  func.func @transform_0(%arg0: i32, %arg1: i32) -> (i32, i32, i32) {
    %c0_i32 = arith.constant 0 : i32
    %c0_i32_0 = arith.constant 0 : i32
    return %arg0, %arg1, %c0_i32 : i32, i32, i32
  }
  func.func @transform_1(%arg0: i32, %arg1: i32) -> (i32, i32, i32) {
    %c0_i32 = arith.constant 0 : i32
    %c0_i32_0 = arith.constant 0 : i32
    %c0_i32_1 = arith.constant 0 : i32
    return %arg0, %c0_i32, %c0_i32_0 : i32, i32, i32
  }
  func.func @transform_2(%arg0: i32, %arg1: i32) -> (i32, i32, i32) {
    %c0_i32 = arith.constant 0 : i32
    %c0_i32_0 = arith.constant 0 : i32
    return %arg0, %arg1, %c0_i32 : i32, i32, i32
  }
}

</mosaic_0001>

<llo_original>
// kernel: tpu_custom_call.1
$region0: #{tpu_custom_call.1}
  #allocation0 [shape = 'u32[]', space=smem, size = 0x4, offset = 0x4, fixed_abs, tag = 'smem constant byte address 0x4 - core index']
  #allocation1 [shape = 'u32[144,128]{1,0:T(1,128)}', space=vmem, size = 0x12000, scoped, tag = 'internal scratch']
  %s0 = inlined_call_operand.hbm [shape: f32[8,16,32], index: 0, kind: input, shape index: {}]
  %s1 = inlined_call_operand.hbm [shape: f32[8,32,32], index: 1, kind: input, shape index: {}]
  %s2 = inlined_call_operand.hbm [shape: f32[1,16,256], index: 2, kind: output, shape index: {}]
  %s3 = sld [smem:[#allocation0]]
  $region26: #{tpu_custom_call.1} parent=0
    _
  %s5 = ssub.s32 1, %s3
  %s6 = scalar_select 0, %s5, %s3
  $region1: #{tpu_custom_call.1} parent=0
    #allocation2 [shape = 'u8[65536]{0}', space=vmem, size = 0x10000, scoped, tag = 'input window, operand 0, single buffered']
    #allocation3 [shape = 's32[1]{0}', space=sflag, size = 0x4, scoped, tag = 'scoped memory for tpu_custom_call.1']
    #allocation4 [shape = 's32[1]{0}', space=sflag, size = 0x4, scoped, tag = 'scoped memory for tpu_custom_call.1']
    #allocation5 [shape = 'u8[131072]{0}', space=vmem, size = 0x20000, scoped, tag = 'input window, operand 1, single buffered']
    #allocation6 [shape = 's32[1]{0}', space=sflag, size = 0x4, scoped, tag = 'scoped memory for tpu_custom_call.1']
    #allocation7 [shape = 'u8[16384]{0}', space=vmem, size = 0x4000, scoped, tag = 'output window, operand 0, single buffered']
    %7 = vsyncpa [#allocation3], 0
    %8 = vsyncpa [#allocation6], 0
    %9 = vsyncpa [#allocation4], 0
    // Predicated region
    $region2: #{tpu_custom_call.1} parent=1 // pred_check
      _
    $region3: #{tpu_custom_call.1} parent=1 // pred_check_branch
      %11 = sbr.rel (0) target = $region5
    $region4: #{tpu_custom_call.1} parent=1 // pred_region
      %s13 = ssub.s32 2048, 2048
      %14 = vsyncadd [#allocation3], %s13
      %s15 = sshll.u32 [#allocation2], 4
      %s16 = int_to_ptr.vmem [resolvable:$true] %s15
      %21 = dma.hbm_to_vmem [thread:$0]  %s0, 2048, %s16, [#allocation3], 128, 128, 8
    $region5: #{tpu_custom_call.1} parent=1 // pred_fallthru
      _
    // Predicated region
    $region6: #{tpu_custom_call.1} parent=1 // pred_check
      _
    $region7: #{tpu_custom_call.1} parent=1 // pred_check_branch
      %23 = sbr.rel (0) target = $region9
    $region8: #{tpu_custom_call.1} parent=1 // pred_region
      %s25 = ssub.s32 4096, 4096
      %26 = vsyncadd [#allocation6], %s25
      %s27 = sshll.u32 [#allocation5], 4
      %s28 = int_to_ptr.vmem [resolvable:$true] %s27
      %33 = dma.hbm_to_vmem [thread:$0]  %s1, 4096, %s28, [#allocation6], 128, 128, 8
    $region9: #{tpu_custom_call.1} parent=1 // pred_fallthru
      _
    // Predicated region
    $region10: #{tpu_custom_call.1} parent=1 // pred_check
      _
    $region11: #{tpu_custom_call.1} parent=1 // pred_check_branch
      %35 = sbr.rel (0) target = $region13
    $region12: #{tpu_custom_call.1} parent=1 // pred_region
      %36 = dma.done [#allocation3], 2048
    $region13: #{tpu_custom_call.1} parent=1 // pred_fallthru
      _
    // Predicated region
    $region14: #{tpu_custom_call.1} parent=1 // pred_check
      _
    $region15: #{tpu_custom_call.1} parent=1 // pred_check_branch
      %38 = sbr.rel (0) target = $region17
    $region16: #{tpu_custom_call.1} parent=1 // pred_region
      %39 = dma.done [#allocation6], 4096
    $region17: #{tpu_custom_call.1} parent=1 // pred_fallthru
      _
    %v40 = vld [vmem:[#allocation2] sm:$0xff]
    %v41 = vld [vmem:[#allocation2 + $0x8] sm:$0xff]
    %v42 = vld [vmem:[#allocation5] sm:$0xff]
    %v43 = vld [vmem:[#allocation5 + $0x8] sm:$0xff]
    %v44 = vld [vmem:[#allocation5 + $0x10] sm:$0xff]
    %v45 = vld [vmem:[#allocation5 + $0x18] sm:$0xff]
    %vm46 = vcmask 261120
    %v48 = vsel %vm46, %v40, 0
    %v51 = vsel %vm46, %v41, 0
    %53 = vmatprep.subr.mxu0 0.0
    %54 = vmatpush1.msra.mxu0 %v42
    %55 = vmatprep.subr.mxu0 0.0
    %56 = vmatpush1.msra.mxu0 %v43
    %57 = vmatprep.subr.mxu0 0.0
    %58 = vmatpush1.msra.mxu0 %v44
    %59 = vmatprep.subr.mxu0 0.0
    %60 = vmatpush1.msra.mxu0 %v45
    %61 = vmatprep.subr.mxu0 0.0
    %62 = vmatpush1.msra.mxu0 0.0
    %63 = vmatprep.subr.mxu0 0.0
    %64 = vmatpush1.msra.mxu0 0.0
    %65 = vmatprep.subr.mxu0 0.0
    %66 = vmatpush1.msra.mxu0 0.0
    %67 = vmatprep.subr.mxu0 0.0
    %68 = vmatpush1.msra.mxu0 0.0
    %69 = vmatprep.subr.mxu0 0.0
    %70 = vmatpush1.msra.mxu0 0.0
    %71 = vmatprep.subr.mxu0 0.0
    %72 = vmatpush1.msra.mxu0 0.0
    %73 = vmatprep.subr.mxu0 0.0
    %74 = vmatpush1.msra.mxu0 0.0
    %75 = vmatprep.subr.mxu0 0.0
    %76 = vmatpush1.msra.mxu0 0.0
    %77 = vmatprep.subr.mxu0 0.0
    %78 = vmatpush1.msra.mxu0 0.0
    %79 = vmatprep.subr.mxu0 0.0
    %80 = vmatpush1.msra.mxu0 0.0
    %81 = vmatprep.subr.mxu0 0.0
    %82 = vmatpush1.msra.mxu0 0.0
    %83 = vmatprep.subr.mxu0 0.0
    %84 = vmatpush1.msra.mxu0 0.0
    %85 = vmatprep.subr.mxu0 0.0
    %86 = vmatpush1.msra.mxu0 0.0
    %87 = vmatprep.subr.mxu0 0.0
    %88 = vmatpush1.msra.mxu0 0.0
    %89 = vmatprep.subr.mxu0 0.0
    %90 = vmatpush1.msra.mxu0 0.0
    %91 = vmatprep.subr.mxu0 0.0
    %92 = vmatpush1.msra.mxu0 0.0
    %93 = vmatprep.subr.mxu0 0.0
    %94 = vmatpush1.msra.mxu0 0.0
    %95 = vmatprep.subr.mxu0 0.0
    %96 = vmatpush1.msra.mxu0 0.0
    %97 = vmatprep.subr.mxu0 0.0
    %98 = vmatpush1.msra.mxu0 0.0
    %99 = vmatprep.subr.mxu0 0.0
    %100 = vmatpush1.msra.mxu0 0.0
    %101 = vmatprep.subr.mxu0 0.0
    %102 = vmatpush1.msra.mxu0 0.0
    %103 = vmatprep.subr.mxu0 0.0
    %104 = vmatpush1.msra.mxu0 0.0
    %105 = vmatprep.subr.mxu0 0.0
    %106 = vmatpush1.msra.mxu0 0.0
    %107 = vmatprep.subr.mxu0 0.0
    %108 = vmatpush1.msra.mxu0 0.0
    %109 = vmatprep.subr.mxu0 0.0
    %110 = vmatpush1.msra.mxu0 0.0
    %111 = vmatprep.subr.mxu0 0.0
    %112 = vmatpush1.msra.mxu0 0.0
    %113 = vmatprep.subr.mxu0 0.0
    %114 = vmatpush1.msra.mxu0 0.0
    %115 = vmatprep.subr.mxu0 0.0
    %116 = vmatpush1.msra.mxu0 0.0
    %117 = vmatprep.mubr.f32.mxu0 0.0
    %118 = vmatmul.mubr.f32.gmra.mrb[0].mxu0 %v48
    %v119 = vpop.f32.mrb[0].mxu0
    %v120 = vadd.f32 0.0, %v119
    %v121 = vpop.f32.mrb[0].mxu0
    %122 = vmatprep.mubr.f32.mxu0 0.0
    %123 = vmatmul.mubr.f32.gmra.mrb[0].mxu0 %v51
    %v124 = vpop.f32.mrb[0].mxu0
    %v125 = vadd.f32 0.0, %v124
    %v126 = vpop.f32.mrb[0].mxu0
    %127 = vdwg.mxu0
    %s128 = scalar_lea.vmem [#allocation2], 16
    %v129 = vld [vmem:[%s128] sm:$0xff]
    %v130 = vld [vmem:[%s128 + $0x8] sm:$0xff]
    %s131 = scalar_lea.vmem [#allocation5], 32
    %v132 = vld [vmem:[%s131] sm:$0xff]
    %v133 = vld [vmem:[%s131 + $0x8] sm:$0xff]
    %v134 = vld [vmem:[%s131 + $0x10] sm:$0xff]
    %v135 = vld [vmem:[%s131 + $0x18] sm:$0xff]
    %v137 = vsel %vm46, %v129, 0
    %v140 = vsel %vm46, %v130, 0
    %142 = vmatprep.subr.mxu0 0.0
    %143 = vmatpush1.msra.mxu0 %v132
    %144 = vmatprep.subr.mxu0 0.0
    %145 = vmatpush1.msra.mxu0 %v133
    %146 = vmatprep.subr.mxu0 0.0
    %147 = vmatpush1.msra.mxu0 %v134
    %148 = vmatprep.subr.mxu0 0.0
    %149 = vmatpush1.msra.mxu0 %v135
    %150 = vmatprep.subr.mxu0 0.0
    %151 = vmatpush1.msra.mxu0 0.0
    %152 = vmatprep.subr.mxu0 0.0
    %153 = vmatpush1.msra.mxu0 0.0
    %154 = vmatprep.subr.mxu0 0.0
    %155 = vmatpush1.msra.mxu0 0.0
    %156 = vmatprep.subr.mxu0 0.0
    %157 = vmatpush1.msra.mxu0 0.0
    %158 = vmatprep.subr.mxu0 0.0
    %159 = vmatpush1.msra.mxu0 0.0
    %160 = vmatprep.subr.mxu0 0.0
    %161 = vmatpush1.msra.mxu0 0.0
    %162 = vmatprep.subr.mxu0 0.0
    %163 = vmatpush1.msra.mxu0 0.0
    %164 = vmatprep.subr.mxu0 0.0
    %165 = vmatpush1.msra.mxu0 0.0
    %166 = vmatprep.subr.mxu0 0.0
    %167 = vmatpush1.msra.mxu0 0.0
    %168 = vmatprep.subr.mxu0 0.0
    %169 = vmatpush1.msra.mxu0 0.0
    %170 = vmatprep.subr.mxu0 0.0
    %171 = vmatpush1.msra.mxu0 0.0
    %172 = vmatprep.subr.mxu0 0.0
    %173 = vmatpush1.msra.mxu0 0.0
    %174 = vmatprep.subr.mxu0 0.0
    %175 = vmatpush1.msra.mxu0 0.0
    %176 = vmatprep.subr.mxu0 0.0
    %177 = vmatpush1.msra.mxu0 0.0
    %178 = vmatprep.subr.mxu0 0.0
    %179 = vmatpush1.msra.mxu0 0.0
    %180 = vmatprep.subr.mxu0 0.0
    %181 = vmatpush1.msra.mxu0 0.0
    %182 = vmatprep.subr.mxu0 0.0
    %183 = vmatpush1.msra.mxu0 0.0
    %184 = vmatprep.subr.mxu0 0.0
    %185 = vmatpush1.msra.mxu0 0.0
    %186 = vmatprep.subr.mxu0 0.0
    %187 = vmatpush1.msra.mxu0 0.0
    %188 = vmatprep.subr.mxu0 0.0
    %189 = vmatpush1.msra.mxu0 0.0
    %190 = vmatprep.subr.mxu0 0.0
    %191 = vmatpush1.msra.mxu0 0.0
    %192 = vmatprep.subr.mxu0 0.0
    %193 = vmatpush1.msra.mxu0 0.0
    %194 = vmatprep.subr.mxu0 0.0
    %195 = vmatpush1.msra.mxu0 0.0
    %196 = vmatprep.subr.mxu0 0.0
    %197 = vmatpush1.msra.mxu0 0.0
    %198 = vmatprep.subr.mxu0 0.0
    %199 = vmatpush1.msra.mxu0 0.0
    %200 = vmatprep.subr.mxu0 0.0
    %201 = vmatpush1.msra.mxu0 0.0
    %202 = vmatprep.subr.mxu0 0.0
    %203 = vmatpush1.msra.mxu0 0.0
    %204 = vmatprep.subr.mxu0 0.0
    %205 = vmatpush1.msra.mxu0 0.0
    %206 = vmatprep.mubr.f32.mxu0 0.0
    %207 = vmatmul.mubr.f32.gmra.mrb[0].mxu0 %v137
    %v208 = vpop.f32.mrb[0].mxu0
    %v209 = vadd.f32 0.0, %v208
    %v210 = vpop.f32.mrb[0].mxu0
    %211 = vmatprep.mubr.f32.mxu0 0.0
    %212 = vmatmul.mubr.f32.gmra.mrb[0].mxu0 %v140
    %v213 = vpop.f32.mrb[0].mxu0
    %v214 = vadd.f32 0.0, %v213
    %v215 = vpop.f32.mrb[0].mxu0
    %216 = vdwg.mxu0
    %s217 = scalar_lea.vmem [#allocation2], 32
    %v218 = vld [vmem:[%s217] sm:$0xff]
    %v219 = vld [vmem:[%s217 + $0x8] sm:$0xff]
    %s220 = scalar_lea.vmem [#allocation5], 64
    %v221 = vld [vmem:[%s220] sm:$0xff]
    %v222 = vld [vmem:[%s220 + $0x8] sm:$0xff]
    %v223 = vld [vmem:[%s220 + $0x10] sm:$0xff]
    %v224 = vld [vmem:[%s220 + $0x18] sm:$0xff]
    %v226 = vsel %vm46, %v218, 0
    %v229 = vsel %vm46, %v219, 0
    %231 = vmatprep.subr.mxu0 0.0
    %232 = vmatpush1.msra.mxu0 %v221
    %233 = vmatprep.subr.mxu0 0.0
    %234 = vmatpush1.msra.mxu0 %v222
    %235 = vmatprep.subr.mxu0 0.0
    %236 = vmatpush1.msra.mxu0 %v223
    %237 = vmatprep.subr.mxu0 0.0
    %238 = vmatpush1.msra.mxu0 %v224
    %239 = vmatprep.subr.mxu0 0.0
    %240 = vmatpush1.msra.mxu0 0.0
    %241 = vmatprep.subr.mxu0 0.0
    %242 = vmatpush1.msra.mxu0 0.0
    %243 = vmatprep.subr.mxu0 0.0
    %244 = vmatpush1.msra.mxu0 0.0
    %245 = vmatprep.subr.mxu0 0.0
    %246 = vmatpush1.msra.mxu0 0.0
    %247 = vmatprep.subr.mxu0 0.0
    %248 = vmatpush1.msra.mxu0 0.0
    %249 = vmatprep.subr.mxu0 0.0
    %250 = vmatpush1.msra.mxu0 0.0
    %251 = vmatprep.subr.mxu0 0.0
    %252 = vmatpush1.msra.mxu0 0.0
    %253 = vmatprep.subr.mxu0 0.0
    %254 = vmatpush1.msra.mxu0 0.0
    %255 = vmatprep.subr.mxu0 0.0
    %256 = vmatpush1.msra.mxu0 0.0
    %257 = vmatprep.subr.mxu0 0.0
    %258 = vmatpush1.msra.mxu0 0.0
    %259 = vmatprep.subr.mxu0 0.0
    %260 = vmatpush1.msra.mxu0 0.0
    %261 = vmatprep.subr.mxu0 0.0
    %262 = vmatpush1.msra.mxu0 0.0
    %263 = vmatprep.subr.mxu0 0.0
    %264 = vmatpush1.msra.mxu0 0.0
    %265 = vmatprep.subr.mxu0 0.0
    %266 = vmatpush1.msra.mxu0 0.0
    %267 = vmatprep.subr.mxu0 0.0
    %268 = vmatpush1.msra.mxu0 0.0
    %269 = vmatprep.subr.mxu0 0.0
    %270 = vmatpush1.msra.mxu0 0.0
    %271 = vmatprep.subr.mxu0 0.0
    %272 = vmatpush1.msra.mxu0 0.0
    %273 = vmatprep.subr.mxu0 0.0
    %274 = vmatpush1.msra.mxu0 0.0
    %275 = vmatprep.subr.mxu0 0.0
    %276 = vmatpush1.msra.mxu0 0.0
    %277 = vmatprep.subr.mxu0 0.0
    %278 = vmatpush1.msra.mxu0 0.0
    %279 = vmatprep.subr.mxu0 0.0
    %280 = vmatpush1.msra.mxu0 0.0
    %281 = vmatprep.subr.mxu0 0.0
    %282 = vmatpush1.msra.mxu0 0.0
    %283 = vmatprep.subr.mxu0 0.0
    %284 = vmatpush1.msra.mxu0 0.0
    %285 = vmatprep.subr.mxu0 0.0
    %286 = vmatpush1.msra.mxu0 0.0
    %287 = vmatprep.subr.mxu0 0.0
    %288 = vmatpush1.msra.mxu0 0.0
    %289 = vmatprep.subr.mxu0 0.0
    %290 = vmatpush1.msra.mxu0 0.0
    %291 = vmatprep.subr.mxu0 0.0
    %292 = vmatpush1.msra.mxu0 0.0
    %293 = vmatprep.subr.mxu0 0.0
    %294 = vmatpush1.msra.mxu0 0.0
    %295 = vmatprep.mubr.f32.mxu0 0.0
    %296 = vmatmul.mubr.f32.gmra.mrb[0].mxu0 %v226
    %v297 = vpop.f32.mrb[0].mxu0
    %v298 = vadd.f32 0.0, %v297
    %v299 = vpop.f32.mrb[0].mxu0
    %300 = vmatprep.mubr.f32.mxu0 0.0
    %301 = vmatmul.mubr.f32.gmra.mrb[0].mxu0 %v229
    %v302 = vpop.f32.mrb[0].mxu0
    %v303 = vadd.f32 0.0, %v302
    %v304 = vpop.f32.mrb[0].mxu0
    %305 = vdwg.mxu0
    %s306 = scalar_lea.vmem [#allocation2], 48
    %v307 = vld [vmem:[%s306] sm:$0xff]
    %v308 = vld [vmem:[%s306 + $0x8] sm:$0xff]
    %s309 = scalar_lea.vmem [#allocation5], 96
    %v310 = vld [vmem:[%s309] sm:$0xff]
    %v311 = vld [vmem:[%s309 + $0x8] sm:$0xff]
    %v312 = vld [vmem:[%s309 + $0x10] sm:$0xff]
    %v313 = vld [vmem:[%s309 + $0x18] sm:$0xff]
    %v315 = vsel %vm46, %v307, 0
    %v318 = vsel %vm46, %v308, 0
    %320 = vmatprep.subr.mxu0 0.0
    %321 = vmatpush1.msra.mxu0 %v310
    %322 = vmatprep.subr.mxu0 0.0
    %323 = vmatpush1.msra.mxu0 %v311
    %324 = vmatprep.subr.mxu0 0.0
    %325 = vmatpush1.msra.mxu0 %v312
    %326 = vmatprep.subr.mxu0 0.0
    %327 = vmatpush1.msra.mxu0 %v313
    %328 = vmatprep.subr.mxu0 0.0
    %329 = vmatpush1.msra.mxu0 0.0
    %330 = vmatprep.subr.mxu0 0.0
    %331 = vmatpush1.msra.mxu0 0.0
    %332 = vmatprep.subr.mxu0 0.0
    %333 = vmatpush1.msra.mxu0 0.0
    %334 = vmatprep.subr.mxu0 0.0
    %335 = vmatpush1.msra.mxu0 0.0
    %336 = vmatprep.subr.mxu0 0.0
    %337 = vmatpush1.msra.mxu0 0.0
    %338 = vmatprep.subr.mxu0 0.0
    %339 = vmatpush1.msra.mxu0 0.0
    %340 = vmatprep.subr.mxu0 0.0
    %341 = vmatpush1.msra.mxu0 0.0
    %342 = vmatprep.subr.mxu0 0.0
    %343 = vmatpush1.msra.mxu0 0.0
    %344 = vmatprep.subr.mxu0 0.0
    %345 = vmatpush1.msra.mxu0 0.0
    %346 = vmatprep.subr.mxu0 0.0
    %347 = vmatpush1.msra.mxu0 0.0
    %348 = vmatprep.subr.mxu0 0.0
    %349 = vmatpush1.msra.mxu0 0.0
    %350 = vmatprep.subr.mxu0 0.0
    %351 = vmatpush1.msra.mxu0 0.0
    %352 = vmatprep.subr.mxu0 0.0
    %353 = vmatpush1.msra.mxu0 0.0
    %354 = vmatprep.subr.mxu0 0.0
    %355 = vmatpush1.msra.mxu0 0.0
    %356 = vmatprep.subr.mxu0 0.0
    %357 = vmatpush1.msra.mxu0 0.0
    %358 = vmatprep.subr.mxu0 0.0
    %359 = vmatpush1.msra.mxu0 0.0
    %360 = vmatprep.subr.mxu0 0.0
    %361 = vmatpush1.msra.mxu0 0.0
    %362 = vmatprep.subr.mxu0 0.0
    %363 = vmatpush1.msra.mxu0 0.0
    %364 = vmatprep.subr.mxu0 0.0
    %365 = vmatpush1.msra.mxu0 0.0
    %366 = vmatprep.subr.mxu0 0.0
    %367 = vmatpush1.msra.mxu0 0.0
    %368 = vmatprep.subr.mxu0 0.0
    %369 = vmatpush1.msra.mxu0 0.0
    %370 = vmatprep.subr.mxu0 0.0
    %371 = vmatpush1.msra.mxu0 0.0
    %372 = vmatprep.subr.mxu0 0.0
    %373 = vmatpush1.msra.mxu0 0.0
    %374 = vmatprep.subr.mxu0 0.0
    %375 = vmatpush1.msra.mxu0 0.0
    %376 = vmatprep.subr.mxu0 0.0
    %377 = vmatpush1.msra.mxu0 0.0
    %378 = vmatprep.subr.mxu0 0.0
    %379 = vmatpush1.msra.mxu0 0.0
    %380 = vmatprep.subr.mxu0 0.0
    %381 = vmatpush1.msra.mxu0 0.0
    %382 = vmatprep.subr.mxu0 0.0
    %383 = vmatpush1.msra.mxu0 0.0
    %384 = vmatprep.mubr.f32.mxu0 0.0
    %385 = vmatmul.mubr.f32.gmra.mrb[0].mxu0 %v315
    %v386 = vpop.f32.mrb[0].mxu0
    %v387 = vadd.f32 0.0, %v386
    %v388 = vpop.f32.mrb[0].mxu0
    %389 = vmatprep.mubr.f32.mxu0 0.0
    %390 = vmatmul.mubr.f32.gmra.mrb[0].mxu0 %v318
    %v391 = vpop.f32.mrb[0].mxu0
    %v392 = vadd.f32 0.0, %v391
    %v393 = vpop.f32.mrb[0].mxu0
    %394 = vdwg.mxu0
    %s395 = scalar_lea.vmem [#allocation2], 64
    %v396 = vld [vmem:[%s395] sm:$0xff]
    %v397 = vld [vmem:[%s395 + $0x8] sm:$0xff]
    %s398 = scalar_lea.vmem [#allocation5], 128
    %v399 = vld [vmem:[%s398] sm:$0xff]
    %v400 = vld [vmem:[%s398 + $0x8] sm:$0xff]
    %v401 = vld [vmem:[%s398 + $0x10] sm:$0xff]
    %v402 = vld [vmem:[%s398 + $0x18] sm:$0xff]
    %v404 = vsel %vm46, %v396, 0
    %v407 = vsel %vm46, %v397, 0
    %409 = vmatprep.subr.mxu0 0.0
    %410 = vmatpush1.msra.mxu0 %v399
    %411 = vmatprep.subr.mxu0 0.0
    %412 = vmatpush1.msra.mxu0 %v400
    %413 = vmatprep.subr.mxu0 0.0
    %414 = vmatpush1.msra.mxu0 %v401
    %415 = vmatprep.subr.mxu0 0.0
    %416 = vmatpush1.msra.mxu0 %v402
    %417 = vmatprep.subr.mxu0 0.0
    %418 = vmatpush1.msra.mxu0 0.0
    %419 = vmatprep.subr.mxu0 0.0
    %420 = vmatpush1.msra.mxu0 0.0
    %421 = vmatprep.subr.mxu0 0.0
    %422 = vmatpush1.msra.mxu0 0.0
    %423 = vmatprep.subr.mxu0 0.0
    %424 = vmatpush1.msra.mxu0 0.0
    %425 = vmatprep.subr.mxu0 0.0
    %426 = vmatpush1.msra.mxu0 0.0
    %427 = vmatprep.subr.mxu0 0.0
    %428 = vmatpush1.msra.mxu0 0.0
    %429 = vmatprep.subr.mxu0 0.0
    %430 = vmatpush1.msra.mxu0 0.0
    %431 = vmatprep.subr.mxu0 0.0
    %432 = vmatpush1.msra.mxu0 0.0
    %433 = vmatprep.subr.mxu0 0.0
    %434 = vmatpush1.msra.mxu0 0.0
    %435 = vmatprep.subr.mxu0 0.0
    %436 = vmatpush1.msra.mxu0 0.0
    %437 = vmatprep.subr.mxu0 0.0
    %438 = vmatpush1.msra.mxu0 0.0
    %439 = vmatprep.subr.mxu0 0.0
    %440 = vmatpush1.msra.mxu0 0.0
    %441 = vmatprep.subr.mxu0 0.0
    %442 = vmatpush1.msra.mxu0 0.0
    %443 = vmatprep.subr.mxu0 0.0
    %444 = vmatpush1.msra.mxu0 0.0
    %445 = vmatprep.subr.mxu0 0.0
    %446 = vmatpush1.msra.mxu0 0.0
    %447 = vmatprep.subr.mxu0 0.0
    %448 = vmatpush1.msra.mxu0 0.0
    %449 = vmatprep.subr.mxu0 0.0
    %450 = vmatpush1.msra.mxu0 0.0
    %451 = vmatprep.subr.mxu0 0.0
    %452 = vmatpush1.msra.mxu0 0.0
    %453 = vmatprep.subr.mxu0 0.0
    %454 = vmatpush1.msra.mxu0 0.0
    %455 = vmatprep.subr.mxu0 0.0
    %456 = vmatpush1.msra.mxu0 0.0
    %457 = vmatprep.subr.mxu0 0.0
    %458 = vmatpush1.msra.mxu0 0.0
    %459 = vmatprep.subr.mxu0 0.0
    %460 = vmatpush1.msra.mxu0 0.0
    %461 = vmatprep.subr.mxu0 0.0
    %462 = vmatpush1.msra.mxu0 0.0
    %463 = vmatprep.subr.mxu0 0.0
    %464 = vmatpush1.msra.mxu0 0.0
    %465 = vmatprep.subr.mxu0 0.0
    %466 = vmatpush1.msra.mxu0 0.0
    %467 = vmatprep.subr.mxu0 0.0
    %468 = vmatpush1.msra.mxu0 0.0
    %469 = vmatprep.subr.mxu0 0.0
    %470 = vmatpush1.msra.mxu0 0.0
    %471 = vmatprep.subr.mxu0 0.0
    %472 = vmatpush1.msra.mxu0 0.0
    %473 = vmatprep.mubr.f32.mxu0 0.0
    %474 = vmatmul.mubr.f32.gmra.mrb[0].mxu0 %v404
    %v475 = vpop.f32.mrb[0].mxu0
    %v476 = vadd.f32 0.0, %v475
    %v477 = vpop.f32.mrb[0].mxu0
    %478 = vmatprep.mubr.f32.mxu0 0.0
    %479 = vmatmul.mubr.f32.gmra.mrb[0].mxu0 %v407
    %v480 = vpop.f32.mrb[0].mxu0
    %v481 = vadd.f32 0.0, %v480
    %v482 = vpop.f32.mrb[0].mxu0
    %483 = vdwg.mxu0
    %s484 = scalar_lea.vmem [#allocation2], 80
    %v485 = vld [vmem:[%s484] sm:$0xff]
    %v486 = vld [vmem:[%s484 + $0x8] sm:$0xff]
    %s487 = scalar_lea.vmem [#allocation5], 160
    %v488 = vld [vmem:[%s487] sm:$0xff]
    %v489 = vld [vmem:[%s487 + $0x8] sm:$0xff]
    %v490 = vld [vmem:[%s487 + $0x10] sm:$0xff]
    %v491 = vld [vmem:[%s487 + $0x18] sm:$0xff]
    %v493 = vsel %vm46, %v485, 0
    %v496 = vsel %vm46, %v486, 0
    %498 = vmatprep.subr.mxu0 0.0
    %499 = vmatpush1.msra.mxu0 %v488
    %500 = vmatprep.subr.mxu0 0.0
    %501 = vmatpush1.msra.mxu0 %v489
    %502 = vmatprep.subr.mxu0 0.0
    %503 = vmatpush1.msra.mxu0 %v490
    %504 = vmatprep.subr.mxu0 0.0
    %505 = vmatpush1.msra.mxu0 %v491
    %506 = vmatprep.subr.mxu0 0.0
    %507 = vmatpush1.msra.mxu0 0.0
    %508 = vmatprep.subr.mxu0 0.0
    %509 = vmatpush1.msra.mxu0 0.0
    %510 = vmatprep.subr.mxu0 0.0
    %511 = vmatpush1.msra.mxu0 0.0
    %512 = vmatprep.subr.mxu0 0.0
    %513 = vmatpush1.msra.mxu0 0.0
    %514 = vmatprep.subr.mxu0 0.0
    %515 = vmatpush1.msra.mxu0 0.0
    %516 = vmatprep.subr.mxu0 0.0
    %517 = vmatpush1.msra.mxu0 0.0
    %518 = vmatprep.subr.mxu0 0.0
    %519 = vmatpush1.msra.mxu0 0.0
    %520 = vmatprep.subr.mxu0 0.0
    %521 = vmatpush1.msra.mxu0 0.0
    %522 = vmatprep.subr.mxu0 0.0
    %523 = vmatpush1.msra.mxu0 0.0
    %524 = vmatprep.subr.mxu0 0.0
    %525 = vmatpush1.msra.mxu0 0.0
    %526 = vmatprep.subr.mxu0 0.0
    %527 = vmatpush1.msra.mxu0 0.0
    %528 = vmatprep.subr.mxu0 0.0
    %529 = vmatpush1.msra.mxu0 0.0
    %530 = vmatprep.subr.mxu0 0.0
    %531 = vmatpush1.msra.mxu0 0.0
    %532 = vmatprep.subr.mxu0 0.0
    %533 = vmatpush1.msra.mxu0 0.0
    %534 = vmatprep.subr.mxu0 0.0
    %535 = vmatpush1.msra.mxu0 0.0
    %536 = vmatprep.subr.mxu0 0.0
    %537 = vmatpush1.msra.mxu0 0.0
    %538 = vmatprep.subr.mxu0 0.0
    %539 = vmatpush1.msra.mxu0 0.0
    %540 = vmatprep.subr.mxu0 0.0
    %541 = vmatpush1.msra.mxu0 0.0
    %542 = vmatprep.subr.mxu0 0.0
    %543 = vmatpush1.msra.mxu0 0.0
    %544 = vmatprep.subr.mxu0 0.0
    %545 = vmatpush1.msra.mxu0 0.0
    %546 = vmatprep.subr.mxu0 0.0
    %547 = vmatpush1.msra.mxu0 0.0
    %548 = vmatprep.subr.mxu0 0.0
    %549 = vmatpush1.msra.mxu0 0.0
    %550 = vmatprep.subr.mxu0 0.0
    %551 = vmatpush1.msra.mxu0 0.0
    %552 = vmatprep.subr.mxu0 0.0
    %553 = vmatpush1.msra.mxu0 0.0
    %554 = vmatprep.subr.mxu0 0.0
    %555 = vmatpush1.msra.mxu0 0.0
    %556 = vmatprep.subr.mxu0 0.0
    %557 = vmatpush1.msra.mxu0 0.0
    %558 = vmatprep.subr.mxu0 0.0
    %559 = vmatpush1.msra.mxu0 0.0
    %560 = vmatprep.subr.mxu0 0.0
    %561 = vmatpush1.msra.mxu0 0.0
    %562 = vmatprep.mubr.f32.mxu0 0.0
    %563 = vmatmul.mubr.f32.gmra.mrb[0].mxu0 %v493
    %v564 = vpop.f32.mrb[0].mxu0
    %v565 = vadd.f32 0.0, %v564
    %v566 = vpop.f32.mrb[0].mxu0
    %567 = vmatprep.mubr.f32.mxu0 0.0
    %568 = vmatmul.mubr.f32.gmra.mrb[0].mxu0 %v496
    %v569 = vpop.f32.mrb[0].mxu0
    %v570 = vadd.f32 0.0, %v569
    %v571 = vpop.f32.mrb[0].mxu0
    %572 = vdwg.mxu0
    %s573 = scalar_lea.vmem [#allocation2], 96
    %v574 = vld [vmem:[%s573] sm:$0xff]
    %v575 = vld [vmem:[%s573 + $0x8] sm:$0xff]
    %s576 = scalar_lea.vmem [#allocation5], 192
    %v577 = vld [vmem:[%s576] sm:$0xff]
    %v578 = vld [vmem:[%s576 + $0x8] sm:$0xff]
    %v579 = vld [vmem:[%s576 + $0x10] sm:$0xff]
    %v580 = vld [vmem:[%s576 + $0x18] sm:$0xff]
    %v582 = vsel %vm46, %v574, 0
    %v585 = vsel %vm46, %v575, 0
    %587 = vmatprep.subr.mxu0 0.0
    %588 = vmatpush1.msra.mxu0 %v577
    %589 = vmatprep.subr.mxu0 0.0
    %590 = vmatpush1.msra.mxu0 %v578
    %591 = vmatprep.subr.mxu0 0.0
    %592 = vmatpush1.msra.mxu0 %v579
    %593 = vmatprep.subr.mxu0 0.0
    %594 = vmatpush1.msra.mxu0 %v580
    %595 = vmatprep.subr.mxu0 0.0
    %596 = vmatpush1.msra.mxu0 0.0
    %597 = vmatprep.subr.mxu0 0.0
    %598 = vmatpush1.msra.mxu0 0.0
    %599 = vmatprep.subr.mxu0 0.0
    %600 = vmatpush1.msra.mxu0 0.0
    %601 = vmatprep.subr.mxu0 0.0
    %602 = vmatpush1.msra.mxu0 0.0
    %603 = vmatprep.subr.mxu0 0.0
    %604 = vmatpush1.msra.mxu0 0.0
    %605 = vmatprep.subr.mxu0 0.0
    %606 = vmatpush1.msra.mxu0 0.0
    %607 = vmatprep.subr.mxu0 0.0
    %608 = vmatpush1.msra.mxu0 0.0
    %609 = vmatprep.subr.mxu0 0.0
    %610 = vmatpush1.msra.mxu0 0.0
    %611 = vmatprep.subr.mxu0 0.0
    %612 = vmatpush1.msra.mxu0 0.0
    %613 = vmatprep.subr.mxu0 0.0
    %614 = vmatpush1.msra.mxu0 0.0
    %615 = vmatprep.subr.mxu0 0.0
    %616 = vmatpush1.msra.mxu0 0.0
    %617 = vmatprep.subr.mxu0 0.0
    %618 = vmatpush1.msra.mxu0 0.0
    %619 = vmatprep.subr.mxu0 0.0
    %620 = vmatpush1.msra.mxu0 0.0
    %621 = vmatprep.subr.mxu0 0.0
    %622 = vmatpush1.msra.mxu0 0.0
    %623 = vmatprep.subr.mxu0 0.0
    %624 = vmatpush1.msra.mxu0 0.0
    %625 = vmatprep.subr.mxu0 0.0
    %626 = vmatpush1.msra.mxu0 0.0
    %627 = vmatprep.subr.mxu0 0.0
    %628 = vmatpush1.msra.mxu0 0.0
    %629 = vmatprep.subr.mxu0 0.0
    %630 = vmatpush1.msra.mxu0 0.0
    %631 = vmatprep.subr.mxu0 0.0
    %632 = vmatpush1.msra.mxu0 0.0
    %633 = vmatprep.subr.mxu0 0.0
    %634 = vmatpush1.msra.mxu0 0.0
    %635 = vmatprep.subr.mxu0 0.0
    %636 = vmatpush1.msra.mxu0 0.0
    %637 = vmatprep.subr.mxu0 0.0
    %638 = vmatpush1.msra.mxu0 0.0
    %639 = vmatprep.subr.mxu0 0.0
    %640 = vmatpush1.msra.mxu0 0.0
    %641 = vmatprep.subr.mxu0 0.0
    %642 = vmatpush1.msra.mxu0 0.0
    %643 = vmatprep.subr.mxu0 0.0
    %644 = vmatpush1.msra.mxu0 0.0
    %645 = vmatprep.subr.mxu0 0.0
    %646 = vmatpush1.msra.mxu0 0.0
    %647 = vmatprep.subr.mxu0 0.0
    %648 = vmatpush1.msra.mxu0 0.0
    %649 = vmatprep.subr.mxu0 0.0
    %650 = vmatpush1.msra.mxu0 0.0
    %651 = vmatprep.mubr.f32.mxu0 0.0
    %652 = vmatmul.mubr.f32.gmra.mrb[0].mxu0 %v582
    %v653 = vpop.f32.mrb[0].mxu0
    %v654 = vadd.f32 0.0, %v653
    %v655 = vpop.f32.mrb[0].mxu0
    %656 = vmatprep.mubr.f32.mxu0 0.0
    %657 = vmatmul.mubr.f32.gmra.mrb[0].mxu0 %v585
    %v658 = vpop.f32.mrb[0].mxu0
    %v659 = vadd.f32 0.0, %v658
    %v660 = vpop.f32.mrb[0].mxu0
    %661 = vdwg.mxu0
    %s662 = scalar_lea.vmem [#allocation2], 112
    %v663 = vld [vmem:[%s662] sm:$0xff]
    %v664 = vld [vmem:[%s662 + $0x8] sm:$0xff]
    %s665 = scalar_lea.vmem [#allocation5], 224
    %v666 = vld [vmem:[%s665] sm:$0xff]
    %v667 = vld [vmem:[%s665 + $0x8] sm:$0xff]
    %v668 = vld [vmem:[%s665 + $0x10] sm:$0xff]
    %v669 = vld [vmem:[%s665 + $0x18] sm:$0xff]
    %v671 = vsel %vm46, %v663, 0
    %v674 = vsel %vm46, %v664, 0
    %676 = vmatprep.subr.mxu0 0.0
    %677 = vmatpush1.msra.mxu0 %v666
    %678 = vmatprep.subr.mxu0 0.0
    %679 = vmatpush1.msra.mxu0 %v667
    %680 = vmatprep.subr.mxu0 0.0
    %681 = vmatpush1.msra.mxu0 %v668
    %682 = vmatprep.subr.mxu0 0.0
    %683 = vmatpush1.msra.mxu0 %v669
    %684 = vmatprep.subr.mxu0 0.0
    %685 = vmatpush1.msra.mxu0 0.0
    %686 = vmatprep.subr.mxu0 0.0
    %687 = vmatpush1.msra.mxu0 0.0
    %688 = vmatprep.subr.mxu0 0.0
    %689 = vmatpush1.msra.mxu0 0.0
    %690 = vmatprep.subr.mxu0 0.0
    %691 = vmatpush1.msra.mxu0 0.0
    %692 = vmatprep.subr.mxu0 0.0
    %693 = vmatpush1.msra.mxu0 0.0
    %694 = vmatprep.subr.mxu0 0.0
    %695 = vmatpush1.msra.mxu0 0.0
    %696 = vmatprep.subr.mxu0 0.0
    %697 = vmatpush1.msra.mxu0 0.0
    %698 = vmatprep.subr.mxu0 0.0
    %699 = vmatpush1.msra.mxu0 0.0
    %700 = vmatprep.subr.mxu0 0.0
    %701 = vmatpush1.msra.mxu0 0.0
    %702 = vmatprep.subr.mxu0 0.0
    %703 = vmatpush1.msra.mxu0 0.0
    %704 = vmatprep.subr.mxu0 0.0
    %705 = vmatpush1.msra.mxu0 0.0
    %706 = vmatprep.subr.mxu0 0.0
    %707 = vmatpush1.msra.mxu0 0.0
    %708 = vmatprep.subr.mxu0 0.0
    %709 = vmatpush1.msra.mxu0 0.0
    %710 = vmatprep.subr.mxu0 0.0
    %711 = vmatpush1.msra.mxu0 0.0
    %712 = vmatprep.subr.mxu0 0.0
    %713 = vmatpush1.msra.mxu0 0.0
    %714 = vmatprep.subr.mxu0 0.0
    %715 = vmatpush1.msra.mxu0 0.0
    %716 = vmatprep.subr.mxu0 0.0
    %717 = vmatpush1.msra.mxu0 0.0
    %718 = vmatprep.subr.mxu0 0.0
    %719 = vmatpush1.msra.mxu0 0.0
    %720 = vmatprep.subr.mxu0 0.0
    %721 = vmatpush1.msra.mxu0 0.0
    %722 = vmatprep.subr.mxu0 0.0
    %723 = vmatpush1.msra.mxu0 0.0
    %724 = vmatprep.subr.mxu0 0.0
    %725 = vmatpush1.msra.mxu0 0.0
    %726 = vmatprep.subr.mxu0 0.0
    %727 = vmatpush1.msra.mxu0 0.0
    %728 = vmatprep.subr.mxu0 0.0
    %729 = vmatpush1.msra.mxu0 0.0
    %730 = vmatprep.subr.mxu0 0.0
    %731 = vmatpush1.msra.mxu0 0.0
    %732 = vmatprep.subr.mxu0 0.0
    %733 = vmatpush1.msra.mxu0 0.0
    %734 = vmatprep.subr.mxu0 0.0
    %735 = vmatpush1.msra.mxu0 0.0
    %736 = vmatprep.subr.mxu0 0.0
    %737 = vmatpush1.msra.mxu0 0.0
    %738 = vmatprep.subr.mxu0 0.0
    %739 = vmatpush1.msra.mxu0 0.0
    %740 = vmatprep.mubr.f32.mxu0 0.0
    %741 = vmatmul.mubr.f32.gmra.mrb[0].mxu0 %v671
    %v742 = vpop.f32.mrb[0].mxu0
    %v743 = vadd.f32 0.0, %v742
    %v744 = vpop.f32.mrb[0].mxu0
    %745 = vmatprep.mubr.f32.mxu0 0.0
    %746 = vmatmul.mubr.f32.gmra.mrb[0].mxu0 %v674
    %v747 = vpop.f32.mrb[0].mxu0
    %v748 = vadd.f32 0.0, %v747
    %v749 = vpop.f32.mrb[0].mxu0
    %750 = vdwg.mxu0
    %753 = vrot.lane.b32.xlu0 %v209, 32
    %v754 = vpop.permute.xlu0 %753
    %755 = vrot.lane.b32.xlu0 %v214, 32
    %v756 = vpop.permute.xlu0 %755
    %761 = vrot.lane.b32.xlu0 %v298, 64
    %v762 = vpop.permute.xlu0 %761
    %763 = vrot.lane.b32.xlu0 %v303, 64
    %v764 = vpop.permute.xlu0 %763
    %769 = vrot.lane.b32.xlu0 %v387, 96
    %v770 = vpop.permute.xlu0 %769
    %771 = vrot.lane.b32.xlu0 %v392, 96
    %v772 = vpop.permute.xlu0 %771
    %777 = vrot.lane.b32.xlu0 %v565, 32
    %v778 = vpop.permute.xlu0 %777
    %779 = vrot.lane.b32.xlu0 %v570, 32
    %v780 = vpop.permute.xlu0 %779
    %785 = vrot.lane.b32.xlu0 %v654, 64
    %v786 = vpop.permute.xlu0 %785
    %787 = vrot.lane.b32.xlu0 %v659, 64
    %v788 = vpop.permute.xlu0 %787
    %793 = vrot.lane.b32.xlu0 %v743, 96
    %v794 = vpop.permute.xlu0 %793
    %795 = vrot.lane.b32.xlu0 %v748, 96
    %v796 = vpop.permute.xlu0 %795
    %v799 = vsel %vm46, %v120, %v754
    %v800 = vsel %vm46, %v125, %v756
    %vm801 = vcmask 523264
    %v802 = vsel %vm801, %v799, %v762
    %v803 = vsel %vm801, %v800, %v764
    %vm804 = vcmask 785408
    %v805 = vsel %vm804, %v802, %v770
    %v806 = vsel %vm804, %v803, %v772
    %v807 = vsel %vm46, %v476, %v778
    %v808 = vsel %vm46, %v481, %v780
    %v809 = vsel %vm801, %v807, %v786
    %v810 = vsel %vm801, %v808, %v788
    %v811 = vsel %vm804, %v809, %v794
    %v812 = vsel %vm804, %v810, %v796
    %813 = vst [vmem:[#allocation7] sm:$0xff] %v805
    %814 = vst [vmem:[#allocation7 + $0x8] sm:$0xff] %v811
    %815 = vst [vmem:[#allocation7 + $0x10] sm:$0xff] %v806
    %816 = vst [vmem:[#allocation7 + $0x18] sm:$0xff] %v812
    // Predicated region
    $region18: #{tpu_custom_call.1} parent=1 // pred_check
      _
    $region19: #{tpu_custom_call.1} parent=1 // pred_check_branch
      %818 = sbr.rel (0) target = $region21
    $region20: #{tpu_custom_call.1} parent=1 // pred_region
      %s820 = ssub.s32 512, 512
      %821 = vsyncadd [#allocation4], %s820
      %s822 = sshll.u32 [#allocation7], 4
      %s823 = int_to_ptr.vmem [resolvable:$true] %s822
      %828 = dma.vmem_to_hbm [thread:$0]  %s823, 512, %s2, [#allocation4], 256, 256, 16
    $region21: #{tpu_custom_call.1} parent=1 // pred_fallthru
      _
    // Predicated region
    $region22: #{tpu_custom_call.1} parent=1 // pred_check
      _
    $region23: #{tpu_custom_call.1} parent=1 // pred_check_branch
      %830 = sbr.rel (0) target = $region25
    $region24: #{tpu_custom_call.1} parent=1 // pred_region
      %831 = dma.done [#allocation4], 512
    $region25: #{tpu_custom_call.1} parent=1 // pred_fallthru
      _
    %832 = vsyncpa [#allocation3], 1
    %833 = vsyncpa [#allocation6], 1
    %834 = vsyncpa [#allocation4], 1

</llo_original>
